<compile_context>
chip_gen: v5e
topology: v5e:2x2
jax: 0.10.0
libtpu: 0.0.40
codegen_flags: <defaults>
</compile_context>

<pallas_src>
import jax
import jax.numpy as jnp
from jax.experimental import pallas as pl
from jax.experimental.pallas import tpu as pltpu


def _fused_deconv_kernel(x_ref, w_ref, b_ref, o_ref):
    # x_ref: (d_blk*H, K)   w_ref: (K, L)   b_ref: (1, L)   o_ref: (d_blk, H, L)
    acc = jnp.dot(x_ref[...], w_ref[...], preferred_element_type=jnp.float32)
    y = jnp.maximum(acc + b_ref[...], 0.0).astype(o_ref.dtype)
    # H % 8 == 0 (guaranteed by the wrapper) makes this a pure shape relabel, not a relayout.
    o_ref[...] = y.reshape(o_ref.shape)


def _deconv_mm_kernel(x_ref, w_ref, b_ref, o_ref):
    # x_ref: (tm, Kf)   w_ref: (Kf, Nf)   b_ref: (1, Nf)   o_ref: (tm, Nf)
    acc = jnp.dot(x_ref[...], w_ref[...], preferred_element_type=jnp.float32)
    o_ref[...] = jnp.maximum(acc + b_ref[...], 0.0).astype(o_ref.dtype)


def _fused_path(x, weight, bias, s, compute_dtype, out_dtype, tile_rows):
    N, D, H, W, Cin = x.shape
    Cout = weight.shape[1]
    ND = N * D
    K = W * Cin                  # matmul depth: one full W-line of voxels
    L = s * W * s * Cout         # columns ordered (kh, w, kw, co) == final NDHWC memory order
    c_isz = jnp.dtype(compute_dtype).itemsize
    o_isz = jnp.dtype(out_dtype).itemsize

    # Block-diagonal (in w) weight per kd: B[kd, (w,ci), (kh,w',kw,co)] = W[ci,co,kd,kh,kw]*[w==w'].
    w_r = jnp.transpose(weight, (2, 0, 3, 4, 1))                       # (kd, ci, kh, kw, co)
    eye = jnp.eye(W, dtype=weight.dtype)
    B = (eye[None, :, None, None, :, None, None] *
         w_r[:, None, :, :, None, :, :])                               # (kd, w, ci, kh, w', kw, co)
    B = B.reshape(s, K, L).astype(compute_dtype)
    b_cols = jnp.tile(bias.astype(jnp.float32), s * W * s).reshape(1, L)

    xm = x.reshape(ND * H, K).astype(compute_dtype)                    # pure reshape of NDHWC

    # d_blk (n,d)-planes per tile: largest divisor of ND within the row / VMEM budget,
    # preferring >= 2 tiles so both v7x TensorCores get work.
    max_d = max(1, min(tile_rows // max(H, 1), (6 << 20) // max(1, H * L * o_isz)))
    divisors = [d for d in range(1, ND + 1) if ND % d == 0 and d <= max_d]
    d_blk = max(divisors) if divisors else 1
    if ND >= 2 and ND // d_blk < 2:
        two_tile = [d for d in divisors if ND // d >= 2]
        if two_tile:
            d_blk = max(two_tile)
    n_tiles = ND // d_blk

    cost = pl.CostEstimate(
        flops=2 * s * ND * H * K * L,
        transcendentals=0,
        bytes_accessed=s * ND * H * K * c_isz + s * K * L * c_isz + L * 4
                       + ND * s * H * L * o_isz,
    )

    out = pl.pallas_call(
        _fused_deconv_kernel,
        out_shape=jax.ShapeDtypeStruct((ND, s, H, L), out_dtype),
        grid_spec=pltpu.PrefetchScalarGridSpec(
            num_scalar_prefetch=0,
            grid=(n_tiles, s),
            in_specs=[
                pl.BlockSpec((d_blk * H, K), lambda i, kd: (i, 0)),
                pl.BlockSpec((None, K, L), lambda i, kd: (kd, 0, 0)),
                pl.BlockSpec((1, L), lambda i, kd: (0, 0)),
            ],
            out_specs=pl.BlockSpec((d_blk, None, H, L), lambda i, kd: (i, kd, 0, 0)),
        ),
        compiler_params=pltpu.CompilerParams(
            dimension_semantics=("parallel", "arbitrary")),
        cost_estimate=cost,
    )(xm, B, b_cols)

    # (nd, kd, h, (kh, w, kw, co)) is already the NDHWC memory order -> free views only.
    y = out.reshape(N, D, s, H, s, W, s, Cout)
    return y.reshape(N, D * s, H * s, W * s, Cout)


def _unfused_path(x, weight, bias, s, compute_dtype, out_dtype, tile_rows):
    N, D, H, W, Cin = x.shape
    Cout = weight.shape[1]
    K8 = s ** 3
    Nw = Cout * K8
    M = N * D * H * W
    c_isz = jnp.dtype(compute_dtype).itemsize
    o_isz = jnp.dtype(out_dtype).itemsize

    wm = jnp.transpose(weight, (0, 2, 3, 4, 1)).reshape(Cin, Nw)       # cols (kd, kh, kw, co)

    # Unconditional lane-dense fold: pick F so F*Nw is a multiple of 128 (if achievable), then
    # widen F until input rows reach >=128 lanes too (contiguous DMA, no lane-padded x tile),
    # keeping the block-diagonal weight small.  Rows are zero-padded: no divisibility needed.
    F = 1
    for f in range(1, 129):
        if (f * Nw) % 128 == 0:
            F = f
            break
    while F * Cin < 128 and (2 * F * Cin) * (2 * F * Nw) * c_isz <= (4 << 20):
        F *= 2
    Kf, Nf = F * Cin, F * Nw

    Mrows = pl.cdiv(M, F)
    xm = x.reshape(M, Cin)
    if Mrows * F != M:
        xm = jnp.pad(xm, ((0, Mrows * F - M), (0, 0)))
    xm = xm.reshape(Mrows, Kf).astype(compute_dtype)
    if F > 1:
        wm = jnp.kron(jnp.eye(F, dtype=wm.dtype), wm)                  # (Kf, Nf) block-diagonal
    wm = wm.astype(compute_dtype)
    bm = jnp.tile(bias.astype(jnp.float32), K8 * F).reshape(1, Nf)

    # Row tile: sublane-pack aware (16 for sub-32-bit), VMEM-capped, >=2 tiles when possible.
    sub = 8 if c_isz >= 4 else 16
    vmem_cap = max(sub, ((6 << 20) // max(1, Nf * o_isz)) // sub * sub)
    tm = min(tile_rows, vmem_cap, Mrows)
    if Mrows > 2 * sub:
        tm = min(tm, max(sub, (Mrows // 2) // sub * sub))
    tm = max(sub, tm - tm % sub)
    n_tiles = pl.cdiv(Mrows, tm)
    Mpad = n_tiles * tm
    if Mpad != Mrows:
        xm = jnp.pad(xm, ((0, Mpad - Mrows), (0, 0)))

    cost = pl.CostEstimate(
        flops=2 * Mpad * Kf * Nf,
        transcendentals=0,
        bytes_accessed=(Mpad * Kf + Kf * Nf) * c_isz + Nf * 4 + Mpad * Nf * o_isz,
    )

    out = pl.pallas_call(
        _deconv_mm_kernel,
        out_shape=jax.ShapeDtypeStruct((Mpad, Nf), out_dtype),
        grid_spec=pltpu.PrefetchScalarGridSpec(
            num_scalar_prefetch=0,
            grid=(n_tiles,),
            in_specs=[
                pl.BlockSpec((tm, Kf), lambda i: (i, 0)),
                pl.BlockSpec((Kf, Nf), lambda i: (0, 0)),
                pl.BlockSpec((1, Nf), lambda i: (0, 0)),
            ],
            out_specs=pl.BlockSpec((tm, Nf), lambda i: (i, 0)),
        ),
        compiler_params=pltpu.CompilerParams(dimension_semantics=("parallel",)),
        cost_estimate=cost,
    )(xm, wm, bm)

    # Unfold voxels and interleave (layout transpose left to XLA on this fallback path only).
    out = out[:Mrows].reshape(Mrows * F, Nw)[:M]
    y = out.reshape(N, D, H, W, s, s, s, Cout)
    y = jnp.transpose(y, (0, 1, 4, 2, 5, 3, 6, 7)).reshape(N, D * s, H * s, W * s, Cout)
    return y


def upsampling_deconv_block(x, weight, bias, *, stride=2, tile_rows=4096,
                            compute_dtype=None, out_dtype=None, force_unfused=False):
    """ConvTranspose3d(kernel=stride, padding=0) + ReLU, channels-last activations.

    x:      [N, D, H, W, Cin]          (NDHWC)
    weight: [Cin, Cout, s, s, s]       (PyTorch ConvTranspose3d layout)
    bias:   [Cout]
    returns [N, s*D, s*H, s*W, Cout]   (NDHWC, dtype = out_dtype or x.dtype)
    """
    N, D, H, W, Cin = x.shape
    Cout = weight.shape[1]
    s = stride
    compute_dtype = x.dtype if compute_dtype is None else compute_dtype
    out_dtype = x.dtype if out_dtype is None else out_dtype

    K = W * Cin
    L = s * W * s * Cout
    w_bytes = s * K * L * jnp.dtype(compute_dtype).itemsize
    min_out_tile = H * L * jnp.dtype(out_dtype).itemsize
    fused_ok = (not force_unfused
                and H % 8 == 0                 # in-kernel (rows,L)->(d,H,L) store is a free relabel
                and w_bytes <= (4 << 20)       # folded weight fits comfortably in VMEM
                and min_out_tile <= (6 << 20))  # one (H,W)-plane output tile fits VMEM
    if fused_ok:
        return _fused_path(x, weight, bias, s, compute_dtype, out_dtype, tile_rows)
    return _unfused_path(x, weight, bias, s, compute_dtype, out_dtype, tile_rows)


def upsampling_deconv_block_ncdhw(x_ncdhw, weight, bias, **kw):
    """PyTorch-layout convenience wrapper (pays layout transposes; prefer NDHWC end-to-end)."""
    y = upsampling_deconv_block(jnp.transpose(x_ncdhw, (0, 2, 3, 4, 1)), weight, bias, **kw)
    return jnp.transpose(y, (0, 4, 1, 2, 3))


def _reference_ncdhw(x_ncdhw, weight, bias, stride=2):
    # Pure-JAX reference using the explicit ConvTranspose3d (k=stride, pad=0) formula, NCDHW.
    s = stride
    N, Cin, D, H, W = x_ncdhw.shape
    Cout = weight.shape[1]
    y = jnp.einsum("nidhw,iokpq->nodkhpwq", x_ncdhw, weight)
    y = y.reshape(N, Cout, D * s, H * s, W * s) + bias[None, :, None, None, None]
    return jnp.maximum(y, 0.0)


if __name__ == "__main__":
    key = jax.random.PRNGKey(0)
    k_x, k_w, k_b, k_x2 = jax.random.split(key, 4)

    # Small shapes consistent with the decoder blocks: batch=2, Cin=4, Cout=8, spatial=8^3.
    N, Cin, Cout, D, H, W = 2, 4, 8, 8, 8, 8
    stride = 2

    x_ncdhw = jax.random.normal(k_x, (N, Cin, D, H, W), dtype=jnp.float32)
    # Deterministic PyTorch-style init: U(-sqrt(k), sqrt(k)), k = 1/(Cin * kD*kH*kW).
    fan = Cin * stride * stride * stride
    bound = 1.0 / (fan ** 0.5)
    weight = jax.random.uniform(k_w, (Cin, Cout, stride, stride, stride),
                                minval=-bound, maxval=bound, dtype=jnp.float32)
    bias = jax.random.uniform(k_b, (Cout,), minval=-bound, maxval=bound, dtype=jnp.float32)

    x = jnp.transpose(x_ncdhw, (0, 2, 3, 4, 1))  # channels-last activations end-to-end
    y_ref = jnp.transpose(_reference_ncdhw(x_ncdhw, weight, bias, stride), (0, 2, 3, 4, 1))

    # 1) f32, fused path (kernel writes the interleaved NDHWC layout directly), strict check.
    y = jax.block_until_ready(upsampling_deconv_block(x, weight, bias, stride=stride))
    assert y.shape == (N, D * stride, H * stride, W * stride, Cout), y.shape
    assert jnp.allclose(y, y_ref, atol=1e-5, rtol=1e-5), float(jnp.max(jnp.abs(y - y_ref)))

    # 2) bf16 compute + bf16 output (halves the read pass and the dominant store pass).
    y_bf = jax.block_until_ready(
        upsampling_deconv_block(x, weight, bias, stride=stride,
                                compute_dtype=jnp.bfloat16, out_dtype=jnp.bfloat16))
    assert y_bf.dtype == jnp.bfloat16
    assert jnp.allclose(y_bf.astype(jnp.float32), y_ref, atol=5e-2, rtol=5e-2), \
        float(jnp.max(jnp.abs(y_bf.astype(jnp.float32) - y_ref)))

    # 3) Odd spatial dims -> unfused fallback (padded lane-dense fold, Kf>=128, multi-row pad).
    N2, D2, H2, W2 = 1, 5, 6, 7
    x2_ncdhw = jax.random.normal(k_x2, (N2, Cin, D2, H2, W2), dtype=jnp.float32)
    x2 = jnp.transpose(x2_ncdhw, (0, 2, 3, 4, 1))
    y2 = jax.block_until_ready(upsampling_deconv_block(x2, weight, bias, stride=stride))
    y2_ref = jnp.transpose(_reference_ncdhw(x2_ncdhw, weight, bias, stride), (0, 2, 3, 4, 1))
    assert y2.shape == (N2, D2 * stride, H2 * stride, W2 * stride, Cout), y2.shape
    assert jnp.allclose(y2, y2_ref, atol=1e-5, rtol=1e-5), float(jnp.max(jnp.abs(y2 - y2_ref)))

    # 4) Force the unfused path on the aligned shape (exercises Kf>=128 fold + 2-tile grid).
    y3 = jax.block_until_ready(
        upsampling_deconv_block(x, weight, bias, stride=stride, force_unfused=True))
    assert jnp.allclose(y3, y_ref, atol=1e-5, rtol=1e-5), float(jnp.max(jnp.abs(y3 - y_ref)))

    print("KERNEL_OK")
</pallas_src>

<mosaic_0001>
module attributes {stable_mosaic.version = 11 : i64} {
  func.func @_fused_deconv_kernel(%arg0: i32, %arg1: i32, %arg2: memref<64x32xf32, #tpu.memory_space<vmem>>, %arg3: memref<1x32x256xf32, #tpu.memory_space<vmem>>, %arg4: memref<1x256xf32, #tpu.memory_space<vmem>>, %arg5: memref<8x1x8x256xf32, #tpu.memory_space<vmem>>) attributes {dimension_semantics = [#tpu.dimension_semantics<parallel>, #tpu.dimension_semantics<arbitrary>], iteration_bounds = array<i64: 2, 2>, scalar_prefetch = 0 : i64, scratch_operands = 0 : i64, tpu.core_type = #tpu.core_type<tc>, window_params = [{transform_indices = @transform_0, window_bounds = array<i64: 64, 32>}, {transform_indices = @transform_1, window_bounds = array<i64: 1, 32, 256>}, {pipeline_mode = #tpu.pipeline_mode<synchronous>, transform_indices = @transform_2, window_bounds = array<i64: 1, 256>}, {transform_indices = @transform_3, window_bounds = array<i64: 8, 1, 8, 256>}]} {
    %c0 = arith.constant 0 : index
    %c0_0 = arith.constant 0 : index
    %0 = vector.load %arg2[%c0, %c0_0] : memref<64x32xf32, #tpu.memory_space<vmem>>, vector<64x32xf32>
    %c0_1 = arith.constant 0 : index
    %c0_2 = arith.constant 0 : index
    %c0_3 = arith.constant 0 : index
    %1 = vector.load %arg3[%c0_1, %c0_2, %c0_3] : memref<1x32x256xf32, #tpu.memory_space<vmem>>, vector<1x32x256xf32>
    %2 = vector.shape_cast %1 : vector<1x32x256xf32> to vector<32x256xf32>
    %cst = arith.constant dense<0.000000e+00> : vector<64x256xf32>
    %3 = tpu.matmul %0, %2, %cst {dimension_numbers = #tpu.dot_dimension_numbers<[1], [0], [0], [1], [0, 0, 1, 1], [], []>} : vector<64x32xf32>, vector<32x256xf32>, vector<64x256xf32> -> vector<64x256xf32>
    %c0_4 = arith.constant 0 : index
    %c0_5 = arith.constant 0 : index
    %4 = vector.load %arg4[%c0_4, %c0_5] : memref<1x256xf32, #tpu.memory_space<vmem>>, vector<1x256xf32>
    %5 = vector.broadcast %4 : vector<1x256xf32> to vector<64x256xf32>
    %6 = arith.addf %3, %5 : vector<64x256xf32>
    %cst_6 = arith.constant 0.000000e+00 : f32
    %7 = vector.broadcast %cst_6 : f32 to vector<64x256xf32>
    %8 = arith.maximumf %6, %7 : vector<64x256xf32>
    %9 = vector.shape_cast %8 : vector<64x256xf32> to vector<8x8x256xf32>
    %c0_7 = arith.constant 0 : index
    %c0_8 = arith.constant 0 : index
    %c0_9 = arith.constant 0 : index
    %c0_10 = arith.constant 0 : index
    %10 = vector.load %arg5[%c0_7, %c0_8, %c0_9, %c0_10] : memref<8x1x8x256xf32, #tpu.memory_space<vmem>>, vector<8x1x8x256xf32>
    %11 = vector.shape_cast %10 : vector<8x1x8x256xf32> to vector<8x8x256xf32>
    %12 = vector.shape_cast %9 : vector<8x8x256xf32> to vector<8x1x8x256xf32>
    tpu.vector_store %arg5[%c0_7, %c0_8, %c0_9, %c0_10], %12 {strides = array<i32>} : memref<8x1x8x256xf32, #tpu.memory_space<vmem>>, vector<8x1x8x256xf32>,
    return
  }
  func.func @transform_0(%arg0: i32, %arg1: i32) -> (i32, i32) {
    %c0_i32 = arith.constant 0 : i32
    %c0_i32_0 = arith.constant 0 : i32
    return %arg0, %c0_i32 : i32, i32
  }
  func.func @transform_1(%arg0: i32, %arg1: i32) -> (i32, i32, i32) {
    %c0_i32 = arith.constant 0 : i32
    %c0_i32_0 = arith.constant 0 : i32
    %c0_i32_1 = arith.constant 0 : i32
    return %arg1, %c0_i32, %c0_i32_0 : i32, i32, i32
  }
  func.func @transform_2(%arg0: i32, %arg1: i32) -> (i32, i32) {
    %c0_i32 = arith.constant 0 : i32
    %c0_i32_0 = arith.constant 0 : i32
    %c0_i32_1 = arith.constant 0 : i32
    return %c0_i32, %c0_i32_0 : i32, i32
  }
  func.func @transform_3(%arg0: i32, %arg1: i32) -> (i32, i32, i32, i32) {
    %c0_i32 = arith.constant 0 : i32
    %c0_i32_0 = arith.constant 0 : i32
    %c0_i32_1 = arith.constant 0 : i32
    return %arg0, %arg1, %c0_i32, %c0_i32_0 : i32, i32, i32, i32
  }
}

</mosaic_0001>

<llo_original>
// kernel: tpu_custom_call.1
$region0: #{tpu_custom_call.1}
  #allocation0 [shape = 'u32[]', space=smem, size = 0x4, offset = 0x4, fixed_abs, tag = 'smem constant byte address 0x4 - core index']
  #allocation1 [shape = 'u32[72,128]{1,0:T(1,128)}', space=vmem, size = 0x9000, scoped, tag = 'internal scratch']
  %s0 = inlined_call_operand.vmem [shape: f32[128,32], index: 0, kind: input, shape index: {}]
  %s1 = inlined_call_operand.vmem [shape: f32[2,32,256], index: 1, kind: input, shape index: {}]
  %s2 = inlined_call_operand.vmem [shape: f32[1,256], index: 2, kind: input, shape index: {}]
  %s3 = inlined_call_operand.hbm [shape: f32[16,2,8,256], index: 3, kind: output, shape index: {}]
  %s4 = sld [smem:[#allocation0]]
  $region45: #{tpu_custom_call.1} parent=0
    _
  %s6 = ssub.s32 1, %s4
  %s7 = scalar_select 0, %s6, %s4
  $region1: #{tpu_custom_call.1} parent=0
    #allocation2 [shape = 'u8[131072]{0}', space=vmem, size = 0x20000, scoped, tag = 'output window, operand 0']
    #allocation3 [shape = 's32[2]{0}', space=sflag, size = 0x8, scoped, tag = 'scoped memory for tpu_custom_call.1']
    %8 = vsyncpa [#allocation3], 0
    %s9 = scalar_lea.sflag [#allocation3], 1
    %10 = vsyncpa %s9, 0
    loop: start=0, step=1, limit=6
    $region2: #{tpu_custom_call.1} parent=1 // loop_pre_header
      _
    $region3: #{tpu_custom_call.1} parent=1 // loop_header
      %s12 = sphi 0, %s16
      %p13 = scmp.ge.s32.totalorder %s12, 6
      %s19 = sphi 0, %s31
      %s20 = sphi 0, %s27
      %s21 = sphi 0, %s19
      %s22 = sphi 0, %s20
      %s23 = sphi 0, %s21
      %s24 = sphi 0, %s22
      %s34 = sphi 0, %s36
      %s37 = sphi 0, %s34
      %s38 = sphi 0, %s37
      %s54 = sphi 0, %s38
      %s60 = sphi 0, %s62
      %s63 = sphi 0, %s60
      %s64 = sphi 0, %s63
      %s80 = sphi 0, %s64
      %s84 = sphi 0, %s84
      %s86 = sphi 0, %s84
      %s87 = sphi 0, %s86
      %s101 = sphi 0, %s87
      %s109 = sphi 0, %s111
      %s112 = sphi 0, %s109
      %s113 = sphi 0, %s112
      %s129 = sphi 0, %s113
    $region4: #{tpu_custom_call.1} parent=1 // loop_header_branch
      %15 = sbr.rel (%p13) target = $region8
    $region5: #{tpu_custom_call.1} parent=1 // loop_body
      %s17 = ssub.s32 %s12, 1
      %s18 = ssub.s32 %s12, 2
      %s25 = sadd.s32 1, %s20
      %p26 = scmp.ge.s32.totalorder %s25, 2
      %s27 = scalar_select %p26, 0, %s25
      %s28 = sadd.s32 1, %s19
      %s29 = scalar_select %p26, %s28, %s19
      %p30 = scmp.ge.s32.totalorder %s29, 2
      %s31 = scalar_select %p30, 0, %s29
      %s32 = ssub.s32 %s19, %s31
      %p33 = scmp.eq.s32.totalorder %s32, 0
      %s35 = sadd.s32 %s34, 1
      %s36 = scalar_select %p33, %s34, %s35
      %p39 = pneg %p33
      %p40 = scmp.eq.s32.totalorder %s12, 3
      %p41 = por %p39, %p40
      %p42 = scmp.ne.s32.totalorder %s34, %s37
      %p43 = scmp.eq.s32.totalorder %s12, 0
      %p44 = por %p42, %p43
      %p45 = scmp.ne.s32.totalorder %s34, %s37
      %p46 = scmp.eq.s32.totalorder %s17, 3
      %p47 = por %p45, %p46
      %p48 = scmp.ne.s32.totalorder %s37, %s38
      %p49 = scmp.eq.s32.totalorder %s17, 0
      %p50 = por %p48, %p49
      %p51 = scmp.ne.s32.totalorder %s37, %s38
      %p52 = scmp.eq.s32.totalorder %s18, 3
      %p53 = por %p51, %p52
      %p55 = scmp.ne.s32.totalorder %s38, %s54
      %p56 = scmp.eq.s32.totalorder %s18, 0
      %p57 = por %p55, %p56
      %s58 = ssub.s32 %s20, %s27
      %p59 = scmp.eq.s32.totalorder %s58, 0
      %s61 = sadd.s32 %s60, 1
      %s62 = scalar_select %p59, %s60, %s61
      %p65 = pneg %p59
      %p66 = scmp.eq.s32.totalorder %s12, 3
      %p67 = por %p65, %p66
      %p68 = scmp.ne.s32.totalorder %s60, %s63
      %p69 = scmp.eq.s32.totalorder %s12, 0
      %p70 = por %p68, %p69
      %p71 = scmp.ne.s32.totalorder %s60, %s63
      %p72 = scmp.eq.s32.totalorder %s17, 3
      %p73 = por %p71, %p72
      %p74 = scmp.ne.s32.totalorder %s63, %s64
      %p75 = scmp.eq.s32.totalorder %s17, 0
      %p76 = por %p74, %p75
      %p77 = scmp.ne.s32.totalorder %s63, %s64
      %p78 = scmp.eq.s32.totalorder %s18, 3
      %p79 = por %p77, %p78
      %p81 = scmp.ne.s32.totalorder %s64, %s80
      %p82 = scmp.eq.s32.totalorder %s18, 0
      %p83 = por %p81, %p82
      %s85 = sadd.s32 %s84, 1
      %p88 = scmp.eq.s32.totalorder %s12, 3
      %p89 = scmp.ne.s32.totalorder %s84, %s86
      %p90 = scmp.eq.s32.totalorder %s12, 0
      %p91 = por %p89, %p90
      %p92 = scmp.ne.s32.totalorder %s84, %s86
      %p93 = scmp.eq.s32.totalorder %s17, 3
      %p94 = por %p92, %p93
      %p95 = scmp.ne.s32.totalorder %s86, %s87
      %p96 = scmp.eq.s32.totalorder %s17, 0
      %p97 = por %p95, %p96
      %p98 = scmp.ne.s32.totalorder %s86, %s87
      %p99 = scmp.eq.s32.totalorder %s18, 3
      %p100 = por %p98, %p99
      %p102 = scmp.ne.s32.totalorder %s87, %s101
      %p103 = scmp.eq.s32.totalorder %s18, 0
      %p104 = por %p102, %p103
      %s105 = ssub.s32 %s19, %s31
      %s106 = ssub.s32 %s20, %s27
      %s107 = sor.u32 %s105, %s106
      %p108 = scmp.eq.s32.totalorder %s107, 0
      %s110 = sadd.s32 %s109, 1
      %s111 = scalar_select %p108, %s109, %s110
      %p114 = pneg %p108
      %p115 = scmp.eq.s32.totalorder %s12, 3
      %p116 = por %p114, %p115
      %p117 = scmp.ne.s32.totalorder %s109, %s112
      %p118 = scmp.eq.s32.totalorder %s12, 0
      %p119 = por %p117, %p118
      %p120 = scmp.ne.s32.totalorder %s109, %s112
      %p121 = scmp.eq.s32.totalorder %s17, 3
      %p122 = por %p120, %p121
      %p123 = scmp.ne.s32.totalorder %s112, %s113
      %p124 = scmp.eq.s32.totalorder %s17, 0
      %p125 = por %p123, %p124
      %p126 = scmp.ne.s32.totalorder %s112, %s113
      %p127 = scmp.eq.s32.totalorder %s18, 3
      %p128 = por %p126, %p127
      %p130 = scmp.ne.s32.totalorder %s113, %s129
      %p131 = scmp.eq.s32.totalorder %s18, 0
      %p132 = por %p130, %p131
      %p133 = scmp.le.s32.totalorder 1, %s12
      %p134 = scmp.lt.s32.totalorder %s12, 5
      %p135 = pnand %p133, %p134
      %p136 = pneg %p135
      // Predicated region
      $region9: #{tpu_custom_call.1} parent=5 // pred_check
        _
      $region10: #{tpu_custom_call.1} parent=5 // pred_check_branch
        %138 = sbr.rel (%p135) target = $region12
      $region11: #{tpu_custom_call.1} parent=5 // pred_region
        %s139 = ssub.s32 %s12, 1
        // Predicated region
        $region13: #{tpu_custom_call.1} parent=11 // pred_check
          %p140 = pneg %p97
        $region14: #{tpu_custom_call.1} parent=11 // pred_check_branch
          %142 = sbr.rel (%p140) target = $region16
        $region15: #{tpu_custom_call.1} parent=11 // pred_region
          _
        $region16: #{tpu_custom_call.1} parent=11 // pred_fallthru
          _
      $region12: #{tpu_custom_call.1} parent=5 // pred_fallthru
        _
      %p143 = scmp.lt.s32.totalorder %s12, 4
      // Predicated region
      $region17: #{tpu_custom_call.1} parent=5 // pred_check
        %p144 = pneg %p143
      $region18: #{tpu_custom_call.1} parent=5 // pred_check_branch
        %146 = sbr.rel (%p144) target = $region20
      $region19: #{tpu_custom_call.1} parent=5 // pred_region
        // Predicated region
        $region21: #{tpu_custom_call.1} parent=19 // pred_check
          %p147 = pneg %p44
        $region22: #{tpu_custom_call.1} parent=19 // pred_check_branch
          %149 = sbr.rel (%p147) target = $region24
        $region23: #{tpu_custom_call.1} parent=19 // pred_region
          %s150 = smul.u32 8, %s19
          %p151 = scmp.lt.s32.totalorder %s150, 15
          %s152 = scalar_select %p151, %s150, 15
          %s153 = smul.addr %s152, 8
          %s154 = scalar_lea.vmem %s0, %s153
          %s155 = smul.u32 8, %s19
        $region24: #{tpu_custom_call.1} parent=19 // pred_fallthru
          _
        // Predicated region
        $region25: #{tpu_custom_call.1} parent=19 // pred_check
          %p156 = pneg %p70
        $region26: #{tpu_custom_call.1} parent=19 // pred_check_branch
          %158 = sbr.rel (%p156) target = $region28
        $region27: #{tpu_custom_call.1} parent=19 // pred_region
          %p159 = scmp.lt.s32.totalorder %s20, 1
          %s160 = scalar_select %p159, %s20, 1
          %s161 = smul.addr %s160, 8
          %s162 = smul.addr %s161, 8
          %s163 = scalar_lea.vmem %s1, %s162
        $region28: #{tpu_custom_call.1} parent=19 // pred_fallthru
          _
      $region20: #{tpu_custom_call.1} parent=5 // pred_fallthru
        _
      %p164 = scmp.le.s32.totalorder 1, %s12
      %p165 = scmp.lt.s32.totalorder %s12, 5
      %p166 = pnand %p164, %p165
      %p167 = pneg %p166
      // Predicated region
      $region29: #{tpu_custom_call.1} parent=5 // pred_check
        _
      $region30: #{tpu_custom_call.1} parent=5 // pred_check_branch
        %169 = sbr.rel (%p166) target = $region32
      $region31: #{tpu_custom_call.1} parent=5 // pred_region
        %s170 = ssub.s32 %s12, 1
        %s171 = smul.u32 8, %s21
        %p172 = scmp.lt.s32.totalorder %s171, 15
        %s173 = scalar_select %p172, %s171, 15
        %s174 = smul.addr %s173, 8
        %s175 = scalar_lea.vmem %s0, %s174
        %p176 = pneg %p50
        %p177 = pneg %p47
        %p178 = scmp.lt.s32.totalorder %s22, 1
        %s179 = scalar_select %p178, %s22, 1
        %s180 = smul.addr %s179, 8
        %s181 = smul.addr %s180, 8
        %s182 = scalar_lea.vmem %s1, %s181
        %p183 = pneg %p76
        %p184 = pneg %p73
        %p185 = pneg %p97
        %p186 = pneg %p94
        %p187 = pneg %p125
        %p188 = pneg %p122
        %s189 = sand.u32 %s112, 1
        %s190 = scalar_lea.sflag [#allocation3], %s189
        %s191 = sand.u32 %s112, 1
        %s192 = smul.addr %s191, 128
        %s193 = scalar_lea.vmem [#allocation2], %s192
        %s194 = smul.u32 8, %s21
        %p195 = scmp.lt.s32.totalorder %s194, 15
        %s196 = scalar_select %p195, %s194, 15
        %s197 = smul.addr %s196, 8
        %s198 = scalar_lea.vmem %s0, %s197
        %s199 = smul.u32 8, %s21
        %p200 = scmp.lt.s32.totalorder %s22, 1
        %s201 = scalar_select %p200, %s22, 1
        %s202 = smul.addr %s201, 8
        %s203 = smul.addr %s202, 8
        %s204 = scalar_lea.vmem %s1, %s203
        %s205 = smul.u32 8, %s21
        %v206 = vld [vmem:[%s198] sm:$0xff]
        %v207 = vld [vmem:[%s198 + $0x8] sm:$0xff]
        %v208 = vld [vmem:[%s198 + $0x10] sm:$0xff]
        %v209 = vld [vmem:[%s198 + $0x18] sm:$0xff]
        %v210 = vld [vmem:[%s198 + $0x20] sm:$0xff]
        %v211 = vld [vmem:[%s198 + $0x28] sm:$0xff]
        %v212 = vld [vmem:[%s198 + $0x30] sm:$0xff]
        %v213 = vld [vmem:[%s198 + $0x38] sm:$0xff]
        %v214 = vld [vmem:[%s204] sm:$0xff]
        %v215 = vld [vmem:[%s204 + $0x8] sm:$0xff]
        %v216 = vld [vmem:[%s204 + $0x10] sm:$0xff]
        %v217 = vld [vmem:[%s204 + $0x18] sm:$0xff]
        %v218 = vld [vmem:[%s204 + $0x20] sm:$0xff]
        %v219 = vld [vmem:[%s204 + $0x28] sm:$0xff]
        %v220 = vld [vmem:[%s204 + $0x30] sm:$0xff]
        %v221 = vld [vmem:[%s204 + $0x38] sm:$0xff]
        %v222 = vld [vmem:[%s2] sm:$0x3]
        %v224 = vperm.slane %v222, 0
        %v225 = vperm.slane %v222, 1
        %vm228 = vcmask 261120
        %v230 = vsel %vm228, %v206, 0
        %v233 = vsel %vm228, %v207, 0
        %v236 = vsel %vm228, %v208, 0
        %v239 = vsel %vm228, %v209, 0
        %v242 = vsel %vm228, %v210, 0
        %v245 = vsel %vm228, %v211, 0
        %v248 = vsel %vm228, %v212, 0
        %v251 = vsel %vm228, %v213, 0
        %253 = vmatpush.msra.mxu0 0.0
        %254 = vmatpush.msra.mxu0 0.0
        %255 = vmatpush.msra.mxu0 0.0
        %256 = vmatpush.msra.mxu0 0.0
        %257 = vmatpush.msra.mxu0 0.0
        %258 = vmatpush.msra.mxu0 0.0
        %259 = vmatpush.msra.mxu0 0.0
        %260 = vmatpush.msra.mxu0 0.0
        %261 = vmatpush.msra.mxu0 0.0
        %262 = vmatpush.msra.mxu0 0.0
        %263 = vmatpush.msra.mxu0 0.0
        %264 = vmatpush.msra.mxu0 0.0
        %265 = vmatpush.msra.mxu0 %v220
        %266 = vmatpush.msra.mxu0 %v218
        %267 = vmatpush.msra.mxu0 %v216
        %268 = vmatpush.msra.mxu0 %v214
        %269 = vmatmul.f32.gmra.mxu0 %v230
        %v270 = vpop.f32.mrf.mxu0
        %v271 = vadd.f32 %v224, %v270
        %272 = vmatmul.f32.gmra.mxu0 %v233
        %v273 = vpop.f32.mrf.mxu0
        %v274 = vadd.f32 %v224, %v273
        %275 = vmatmul.f32.gmra.mxu0 %v236
        %v276 = vpop.f32.mrf.mxu0
        %v277 = vadd.f32 %v224, %v276
        %278 = vmatmul.f32.gmra.mxu0 %v239
        %v279 = vpop.f32.mrf.mxu0
        %v280 = vadd.f32 %v224, %v279
        %281 = vmatmul.f32.gmra.mxu0 %v242
        %v282 = vpop.f32.mrf.mxu0
        %v283 = vadd.f32 %v224, %v282
        %284 = vmatmul.f32.gmra.mxu0 %v245
        %v285 = vpop.f32.mrf.mxu0
        %v286 = vadd.f32 %v224, %v285
        %287 = vmatmul.f32.gmra.mxu0 %v248
        %v288 = vpop.f32.mrf.mxu0
        %v289 = vadd.f32 %v224, %v288
        %290 = vmatmul.f32.gmra.mxu0 %v251
        %v291 = vpop.f32.mrf.mxu0
        %v292 = vadd.f32 %v224, %v291
        %293 = vdwg.mxu0
        %294 = vmatpush.msra.mxu0 0.0
        %295 = vmatpush.msra.mxu0 0.0
        %296 = vmatpush.msra.mxu0 0.0
        %297 = vmatpush.msra.mxu0 0.0
        %298 = vmatpush.msra.mxu0 0.0
        %299 = vmatpush.msra.mxu0 0.0
        %300 = vmatpush.msra.mxu0 0.0
        %301 = vmatpush.msra.mxu0 0.0
        %302 = vmatpush.msra.mxu0 0.0
        %303 = vmatpush.msra.mxu0 0.0
        %304 = vmatpush.msra.mxu0 0.0
        %305 = vmatpush.msra.mxu0 0.0
        %306 = vmatpush.msra.mxu0 %v221
        %307 = vmatpush.msra.mxu0 %v219
        %308 = vmatpush.msra.mxu0 %v217
        %309 = vmatpush.msra.mxu0 %v215
        %310 = vmatmul.f32.gmra.mxu0 %v230
        %v311 = vpop.f32.mrf.mxu0
        %v312 = vadd.f32 %v225, %v311
        %313 = vmatmul.f32.gmra.mxu0 %v233
        %v314 = vpop.f32.mrf.mxu0
        %v315 = vadd.f32 %v225, %v314
        %316 = vmatmul.f32.gmra.mxu0 %v236
        %v317 = vpop.f32.mrf.mxu0
        %v318 = vadd.f32 %v225, %v317
        %319 = vmatmul.f32.gmra.mxu0 %v239
        %v320 = vpop.f32.mrf.mxu0
        %v321 = vadd.f32 %v225, %v320
        %322 = vmatmul.f32.gmra.mxu0 %v242
        %v323 = vpop.f32.mrf.mxu0
        %v324 = vadd.f32 %v225, %v323
        %325 = vmatmul.f32.gmra.mxu0 %v245
        %v326 = vpop.f32.mrf.mxu0
        %v327 = vadd.f32 %v225, %v326
        %328 = vmatmul.f32.gmra.mxu0 %v248
        %v329 = vpop.f32.mrf.mxu0
        %v330 = vadd.f32 %v225, %v329
        %331 = vmatmul.f32.gmra.mxu0 %v251
        %v332 = vpop.f32.mrf.mxu0
        %v333 = vadd.f32 %v225, %v332
        %334 = vdwg.mxu0
        %v335 = vmax.f32 %v271, 0.0
        %v336 = vmax.f32 %v312, 0.0
        %v337 = vmax.f32 %v274, 0.0
        %v338 = vmax.f32 %v315, 0.0
        %v339 = vmax.f32 %v277, 0.0
        %v340 = vmax.f32 %v318, 0.0
        %v341 = vmax.f32 %v280, 0.0
        %v342 = vmax.f32 %v321, 0.0
        %v343 = vmax.f32 %v283, 0.0
        %v344 = vmax.f32 %v324, 0.0
        %v345 = vmax.f32 %v286, 0.0
        %v346 = vmax.f32 %v327, 0.0
        %v347 = vmax.f32 %v289, 0.0
        %v348 = vmax.f32 %v330, 0.0
        %v349 = vmax.f32 %v292, 0.0
        %v350 = vmax.f32 %v333, 0.0
        %351 = vst [vmem:[%s193] sm:$0xff] %v335
        %352 = vst [vmem:[%s193 + $0x8] sm:$0xff] %v336
        %353 = vst [vmem:[%s193 + $0x10] sm:$0xff] %v337
        %354 = vst [vmem:[%s193 + $0x18] sm:$0xff] %v338
        %355 = vst [vmem:[%s193 + $0x20] sm:$0xff] %v339
        %356 = vst [vmem:[%s193 + $0x28] sm:$0xff] %v340
        %357 = vst [vmem:[%s193 + $0x30] sm:$0xff] %v341
        %358 = vst [vmem:[%s193 + $0x38] sm:$0xff] %v342
        %359 = vst [vmem:[%s193 + $0x40] sm:$0xff] %v343
        %360 = vst [vmem:[%s193 + $0x48] sm:$0xff] %v344
        %361 = vst [vmem:[%s193 + $0x50] sm:$0xff] %v345
        %362 = vst [vmem:[%s193 + $0x58] sm:$0xff] %v346
        %363 = vst [vmem:[%s193 + $0x60] sm:$0xff] %v347
        %364 = vst [vmem:[%s193 + $0x68] sm:$0xff] %v348
        %365 = vst [vmem:[%s193 + $0x70] sm:$0xff] %v349
        %366 = vst [vmem:[%s193 + $0x78] sm:$0xff] %v350
        %s367 = sand.u32 %s112, 1
        %s368 = scalar_lea.sflag [#allocation3], %s367
        %s369 = sand.u32 %s112, 1
        %s370 = smul.addr %s369, 128
        %s371 = scalar_lea.vmem [#allocation2], %s370
        // Predicated region
        $region33: #{tpu_custom_call.1} parent=31 // pred_check
          %p372 = pneg %p122
        $region34: #{tpu_custom_call.1} parent=31 // pred_check_branch
          %374 = sbr.rel (%p372) target = $region36
        $region35: #{tpu_custom_call.1} parent=31 // pred_region
          %s375 = smul.u32 8, %s21
          %377 = vsyncadd %s368, 0
          %s378 = smul.addr %s22, 2
          %s379 = smul.addr %s375, 4
          %s380 = sadd.s32 %s378, %s379
          %s381 = smul.addr %s380, 8
          %s382 = scalar_lea.hbm %s3, %s381
          %s383 = sshll.u32 %s371, 4
          %s384 = int_to_ptr.vmem [resolvable:$true] %s383
          %s385 = sshll.u32 %s382, 4
          %s386 = int_to_ptr.hbm [resolvable:$true] %s385
          %391 = dma.vmem_to_hbm [thread:$0]  %s384, 2048, %s386, %s368, 256, 512, 16
        $region36: #{tpu_custom_call.1} parent=31 // pred_fallthru
          _
      $region32: #{tpu_custom_call.1} parent=5 // pred_fallthru
        _
      %p392 = scmp.le.s32.totalorder 2, %s12
      // Predicated region
      $region37: #{tpu_custom_call.1} parent=5 // pred_check
        %p393 = pneg %p392
      $region38: #{tpu_custom_call.1} parent=5 // pred_check_branch
        %395 = sbr.rel (%p393) target = $region40
      $region39: #{tpu_custom_call.1} parent=5 // pred_region
        %s396 = ssub.s32 %s12, 2
        // Predicated region
        $region41: #{tpu_custom_call.1} parent=39 // pred_check
          %p397 = pneg %p128
        $region42: #{tpu_custom_call.1} parent=39 // pred_check_branch
          %399 = sbr.rel (%p397) target = $region44
        $region43: #{tpu_custom_call.1} parent=39 // pred_region
          %s400 = sand.u32 %s113, 1
          %s401 = scalar_lea.sflag [#allocation3], %s400
          %s402 = sand.u32 %s113, 1
          %s403 = smul.addr %s402, 128
          %s404 = scalar_lea.vmem [#allocation2], %s403
          %406 = dma.done %s401, 2048
        $region44: #{tpu_custom_call.1} parent=39 // pred_fallthru
          _
      $region40: #{tpu_custom_call.1} parent=5 // pred_fallthru
        _
    $region6: #{tpu_custom_call.1} parent=1 // loop_footer
      %s16 = sadd.s32 1, %s12
    $region7: #{tpu_custom_call.1} parent=1 // loop_footer_branch
      %11 = sbr.rel target = $region3
    $region8: #{tpu_custom_call.1} parent=1 // loop_exit
      _
    %407 = vsyncpa [#allocation3], 1
    %s408 = scalar_lea.sflag [#allocation3], 1
    %409 = vsyncpa %s408, 1

</llo_original>
